<compile_context>
chip_gen: v7x
topology: tpu7x:2x2x1
jax: 0.10.0
libtpu: 0.0.40
codegen_flags: <defaults>
</compile_context>

<pallas_src>
import functools

import jax
import jax.numpy as jnp
from jax.experimental import pallas as pl
from jax.experimental.pallas import tpu as pltpu


# ----------------------------------------------------------------------------- helpers

def _vmem_limit(block_bytes):
    # Explicit scoped-VMEM request: generous headroom over the double-buffered blocks,
    # capped at 32 MiB so it stays valid on v7x (64 MiB physical) as well as v5e/v6e.
    return int(min(32 * 1024 * 1024, max(16 * 1024 * 1024, 6 * int(block_bytes))))


def _pick_conv_row_tile(Ho, Wo):
    """Largest TH dividing Ho whose flat tile TH*Wo is lane aligned (%128) and modest."""
    best = Ho
    for th in range(1, Ho):
        if Ho % th:
            continue
        m = th * Wo
        if m % 128 == 0 and m <= 8192:
            best = th
    return best


def _pick_upsample_row_tile(Hout, Wout, nc):
    """Largest multiple-of-8 divisor of Hout whose f32 output tile stays under ~2 MiB."""
    best = Hout
    for th in range(8, Hout, 8):
        if Hout % th == 0 and th * Wout * nc * 4 <= (2 << 20):
            best = th
    return best


def _bilinear_matrix(out_size, in_size):
    """Row-stochastic interpolation matrix matching PyTorch bilinear, align_corners=False."""
    scale = in_size / out_size
    dst = jnp.arange(out_size, dtype=jnp.float32)
    src = (dst + 0.5) * scale - 0.5
    src = jnp.maximum(src, 0.0)                      # PyTorch clamps negative source coords
    i0 = jnp.floor(src).astype(jnp.int32)
    i0 = jnp.clip(i0, 0, in_size - 1)
    i1 = jnp.clip(i0 + 1, 0, in_size - 1)
    w1 = src - i0.astype(jnp.float32)
    w0 = 1.0 - w1
    rows = jnp.arange(out_size)
    W = jnp.zeros((out_size, in_size), dtype=jnp.float32)
    W = W.at[rows, i0].add(w0)
    W = W.at[rows, i1].add(w1)
    return W


# --------------------------------------------- kernel 1: fused conv3x3/s2 + ReLU + 1x1 cls

def _fused_conv_cls_kernel(t00, t01, t02, t10, t11, t12,
                           wbb_ref, bbb_ref, wcls_ref, bcls_ref, o_ref,
                           *, TH, Wo, Cin, nc, compute_dtype):
    # tap refs: t{a}{kw}[0, i, j, ci] == x_pad[n, a + 2*i, kw + 2*j, ci]
    t = pl.program_id(1)
    r0 = t * TH
    taps = {(0, 0): t00, (0, 1): t01, (0, 2): t02,
            (1, 0): t10, (1, 1): t11, (1, 2): t12}

    # In-VMEM im2col: 9 shifted stride-2 views -> (TH*Wo, 9*Cin), (kh, kw, cin) ordered.
    pieces = []
    for kh in range(3):
        a, dh = kh % 2, kh // 2
        for kw in range(3):
            sl = taps[(a, kw)][0, pl.ds(r0 + dh, TH), :, :]          # (TH, Wo, Cin)
            pieces.append(sl.reshape(TH * Wo, Cin))
    cols = jnp.concatenate(pieces, axis=-1).astype(compute_dtype)    # (M_t, 9*Cin)

    # Backbone conv as a matmul (bf16 x bf16 -> f32 acc), bias + ReLU epilogue in f32.
    feat = jnp.dot(cols, wbb_ref[...], preferred_element_type=jnp.float32)
    feat = jnp.maximum(feat + bbb_ref[...], 0.0)                     # (M_t, Cfeat) f32

    # Fused 1x1 classifier (channel dim zero-padded to a lane-aligned width).
    logits = jnp.dot(feat.astype(compute_dtype), wcls_ref[...],
                     preferred_element_type=jnp.float32) + bcls_ref[...]  # (M_t, NCP)

    # Channel-major, spatial-minor (lane-dense) store; drop the zero padding.
    o_ref[0] = logits.T[:nc, :].astype(o_ref.dtype)                  # (nc, M_t)


def fused_conv_classifier(taps, w_bb, b_bb, w_cls_p, b_cls_p,
                          *, nc, out_dtype, compute_dtype):
    N, Hp1, Wo, Cin = taps[0].shape            # Hp1 = Ho + 1
    Ho = Hp1 - 1
    Cfeat = w_bb.shape[1]
    ncp = w_cls_p.shape[1]
    TH = _pick_conv_row_tile(Ho, Wo)
    T = Ho // TH
    M_t = TH * Wo

    kernel = functools.partial(_fused_conv_cls_kernel, TH=TH, Wo=Wo, Cin=Cin,
                               nc=nc, compute_dtype=compute_dtype)

    tap_spec = pl.BlockSpec((1, Hp1, Wo, Cin), lambda n, t: (n, 0, 0, 0))
    in_specs = [tap_spec] * 6 + [
        pl.BlockSpec((9 * Cin, Cfeat), lambda n, t: (0, 0)),
        pl.BlockSpec((1, Cfeat), lambda n, t: (0, 0)),
        pl.BlockSpec((Cfeat, ncp), lambda n, t: (0, 0)),
        pl.BlockSpec((1, ncp), lambda n, t: (0, 0)),
    ]
    out_specs = pl.BlockSpec((1, nc, M_t), lambda n, t: (n, 0, t))

    block_bytes = (6 * Hp1 * Wo * Cin * 4 + 9 * Cin * Cfeat * 2 + Cfeat * 4
                   + Cfeat * ncp * 2 + ncp * 4 + nc * M_t * 2
                   + M_t * (9 * Cin * 2 + Cfeat * 4 + ncp * 4))
    flops = 2 * N * Ho * Wo * (9 * Cin) * Cfeat + 2 * N * Ho * Wo * Cfeat * ncp
    bytes_accessed = (6 * N * Hp1 * Wo * Cin * 4 + 9 * Cin * Cfeat * 2 + Cfeat * 4
                      + Cfeat * ncp * 2 + ncp * 4 + N * nc * Ho * Wo * 2)

    return pl.pallas_call(
        kernel,
        out_shape=jax.ShapeDtypeStruct((N, nc, Ho * Wo), out_dtype),
        grid_spec=pltpu.PrefetchScalarGridSpec(
            num_scalar_prefetch=0, grid=(N, T),
            in_specs=in_specs, out_specs=out_specs),
        compiler_params=pltpu.CompilerParams(
            dimension_semantics=("parallel", "parallel"),
            vmem_limit_bytes=_vmem_limit(block_bytes)),
        cost_estimate=pl.CostEstimate(flops=int(flops), transcendentals=0,
                                      bytes_accessed=int(bytes_accessed)),
    )(*taps, w_bb, b_bb, w_cls_p, b_cls_p)


# --------------------------------------------- kernel 2: bilinear upsample (NCHW output)

def _bilinear_kernel(l_ref, wh_ref, wwt_ref, o_ref):
    # l:(1, nc, Hf, Wf)   wh:(THo, Hf)   wwt:(Wf, Wout)   o:(1, nc, THo, Wout)
    _, nc, Hf, Wf = l_ref.shape
    L = l_ref[0]                                              # (nc, Hf, Wf)

    # Width pass: one large lane-dense 2D matmul  (nc*Hf, Wf) @ (Wf, Wout).
    t1 = jnp.dot(L.reshape(nc * Hf, Wf), wwt_ref[...],
                 preferred_element_type=jnp.float32)          # (nc*Hf, Wout)
    Wout = t1.shape[-1]
    wh = wh_ref[...]                                          # (THo, Hf)
    t1 = t1.reshape(nc, Hf, Wout).astype(wh.dtype)

    # Height pass: channel-batched matmul, emits the NCHW tile directly (no transpose).
    wh_b = jnp.broadcast_to(wh, (nc,) + wh.shape)             # (nc, THo, Hf)
    out = jax.lax.dot_general(wh_b, t1,
                              dimension_numbers=(((2,), (1,)), ((0,), (0,))),
                              preferred_element_type=jnp.float32)   # (nc, THo, Wout)
    o_ref[0] = out.astype(o_ref.dtype)


def bilinear_upsample_nchw(logits4, wh, wwt, *, out_dtype=jnp.float32):
    N, nc, Hf, Wf = logits4.shape
    Hout, Wout = wh.shape[0], wwt.shape[1]
    THo = _pick_upsample_row_tile(Hout, Wout, nc)
    T = Hout // THo

    block_bytes = (nc * Hf * Wf * logits4.dtype.itemsize + THo * Hf * 2 + Wf * Wout * 2
                   + nc * THo * Wout * 4 + nc * Hf * Wout * 4)
    flops = 2 * N * nc * Hf * Wf * Wout + 2 * N * nc * Hout * Hf * Wout
    bytes_accessed = (logits4.size * logits4.dtype.itemsize + wh.size * 2 + wwt.size * 2
                      + N * nc * Hout * Wout * 4)

    return pl.pallas_call(
        _bilinear_kernel,
        out_shape=jax.ShapeDtypeStruct((N, nc, Hout, Wout), out_dtype),
        grid_spec=pltpu.PrefetchScalarGridSpec(
            num_scalar_prefetch=0, grid=(N, T),
            in_specs=[
                pl.BlockSpec((1, nc, Hf, Wf), lambda n, t: (n, 0, 0, 0)),
                pl.BlockSpec((THo, Hf), lambda n, t: (t, 0)),
                pl.BlockSpec((Wf, Wout), lambda n, t: (0, 0)),
            ],
            out_specs=pl.BlockSpec((1, nc, THo, Wout), lambda n, t: (n, 0, t, 0))),
        compiler_params=pltpu.CompilerParams(
            dimension_semantics=("parallel", "parallel"),
            vmem_limit_bytes=_vmem_limit(block_bytes)),
        cost_estimate=pl.CostEstimate(flops=int(flops), transcendentals=0,
                                      bytes_accessed=int(bytes_accessed)),
    )(logits4, wh, wwt)


# ----------------------------------------------------------------------------- model

def init_params(key, c_in, c_feat, num_classes):
    k1, k2, k3, k4 = jax.random.split(key, 4)
    # backbone 3x3 conv weight stored in im2col-matmul layout, rows ordered (kh, kw, cin)
    w_bb = 0.1 * jax.random.normal(k1, (3 * 3 * c_in, c_feat), dtype=jnp.float32)
    b_bb = 0.1 * jax.random.normal(k2, (c_feat,), dtype=jnp.float32)
    # classifier 1x1 conv
    w_cls = 0.1 * jax.random.normal(k3, (c_feat, num_classes), dtype=jnp.float32)
    b_cls = 0.1 * jax.random.normal(k4, (num_classes,), dtype=jnp.float32)
    return dict(w_bb=w_bb, b_bb=b_bb, w_cls=w_cls, b_cls=b_cls)


def deeplabv3_forward(x_nchw, params, *, compute_dtype=jnp.bfloat16):
    """Returns {'out': logits} with logits shaped (N, num_classes, H, W), NCHW like PyTorch."""
    N, Cin, H, W = x_nchw.shape
    assert H % 2 == 0 and W % 2 == 0, "synthetic stride-2 backbone assumes even H, W"
    Ho = (H + 2 - 3) // 2 + 1
    Wo = (W + 2 - 3) // 2 + 1
    Cfeat = params["w_bb"].shape[1]
    nc = params["w_cls"].shape[1]
    ncp = ((nc + 127) // 128) * 128        # lane-aligned classifier width (zero padded)

    # One cheap layout pass over the (small) input: NHWC + conv zero padding, then six
    # stride-2 "tap" views (row parity x kw column shift).  This replaces the 9x im2col
    # HBM blow-up; the actual patch matrix is assembled in VMEM inside the kernel.
    x = jnp.transpose(x_nchw, (0, 2, 3, 1))
    xp = jnp.pad(x, ((0, 0), (1, 1), (1, 1), (0, 0)))
    taps = []
    for a in range(2):                      # row parity (kh % 2)
        for kw in range(3):                 # column shift
            taps.append(xp[:, a:a + 2 * (Ho + 1):2, kw:kw + 2 * Wo:2, :])

    w_bb = params["w_bb"].astype(compute_dtype)                       # (9*Cin, Cfeat)
    b_bb = params["b_bb"].reshape(1, Cfeat).astype(jnp.float32)
    w_cls_p = jnp.zeros((Cfeat, ncp), compute_dtype)
    w_cls_p = w_cls_p.at[:, :nc].set(params["w_cls"].astype(compute_dtype))
    b_cls_p = jnp.zeros((1, ncp), jnp.float32)
    b_cls_p = b_cls_p.at[:, :nc].set(params["b_cls"].astype(jnp.float32).reshape(1, nc))

    # Fused backbone conv + ReLU + 1x1 classifier; logits stored channel-major with a
    # lane-dense spatial-minor layout in bf16.
    logits_flat = fused_conv_classifier(taps, w_bb, b_bb, w_cls_p, b_cls_p,
                                        nc=nc, out_dtype=compute_dtype,
                                        compute_dtype=compute_dtype)
    logits4 = logits_flat.reshape(N, nc, Ho, Wo)     # pure dim split, no data movement

    # F.interpolate(..., size=(H, W), mode='bilinear', align_corners=False)
    wh = _bilinear_matrix(H, Ho).astype(compute_dtype)
    wwt = _bilinear_matrix(W, Wo).T.astype(compute_dtype)
    out = bilinear_upsample_nchw(logits4, wh, wwt, out_dtype=jnp.float32)

    # aux_classifier=None in this instantiation -> only 'out' is produced.
    # TODO(synk): an aux head would reuse fused_conv_classifier + bilinear_upsample_nchw
    # on the backbone's 'aux' feature map.
    return {"out": out}


# ----------------------------------------------------------------------------- reference

def _reference_forward(x_nchw, params):
    """Pure-JAX f32 reference of the same synthetic DeepLabv3 instantiation."""
    N, Cin, H, W = x_nchw.shape
    Cfeat = params["w_bb"].shape[1]
    x = jnp.transpose(x_nchw, (0, 2, 3, 1))
    w4 = params["w_bb"].reshape(3, 3, Cin, Cfeat)           # (kh, kw, cin, cout) = HWIO
    feat = jax.lax.conv_general_dilated(
        x, w4, window_strides=(2, 2), padding=((1, 1), (1, 1)),
        dimension_numbers=("NHWC", "HWIO", "NHWC"))
    feat = jnp.maximum(feat + params["b_bb"], 0.0)
    logits = jnp.einsum("nhwc,ck->nhwk", feat, params["w_cls"]) + params["b_cls"]
    Ho, Wo = logits.shape[1], logits.shape[2]
    wh = _bilinear_matrix(H, Ho)
    ww = _bilinear_matrix(W, Wo)
    return jnp.einsum("oh,pw,nhwc->ncop", wh, ww, logits)


# ----------------------------------------------------------------------------- main

if __name__ == "__main__":
    key = jax.random.PRNGKey(0)
    k_x, k_p = jax.random.split(key)

    N, Cin, H, W = 2, 4, 16, 16
    Cfeat, num_classes = 32, 5

    x = jax.random.normal(k_x, (N, Cin, H, W), dtype=jnp.float32)
    params = init_params(k_p, Cin, Cfeat, num_classes)

    result = deeplabv3_forward(x, params)
    out = jax.block_until_ready(result["out"])

    assert out.shape == (N, num_classes, H, W), out.shape
    assert bool(jnp.all(jnp.isfinite(out)))

    ref = _reference_forward(x, params)
    max_err = float(jnp.max(jnp.abs(out - ref)))
    assert max_err < 0.15, f"mismatch vs f32 reference: max abs err {max_err}"

    print("KERNEL_OK")
</pallas_src>

<mosaic_0001>
module attributes {stable_mosaic.version = 11 : i64} {
  func.func @_fused_conv_cls_kernel(%arg0: i32, %arg1: i32, %arg2: memref<1x9x8x4xf32, #tpu.memory_space<vmem>>, %arg3: memref<1x9x8x4xf32, #tpu.memory_space<vmem>>, %arg4: memref<1x9x8x4xf32, #tpu.memory_space<vmem>>, %arg5: memref<1x9x8x4xf32, #tpu.memory_space<vmem>>, %arg6: memref<1x9x8x4xf32, #tpu.memory_space<vmem>>, %arg7: memref<1x9x8x4xf32, #tpu.memory_space<vmem>>, %arg8: memref<36x32xbf16, #tpu.memory_space<vmem>>, %arg9: memref<1x32xf32, #tpu.memory_space<vmem>>, %arg10: memref<32x128xbf16, #tpu.memory_space<vmem>>, %arg11: memref<1x128xf32, #tpu.memory_space<vmem>>, %arg12: memref<1x5x64xbf16, #tpu.memory_space<vmem>>) attributes {dimension_semantics = [#tpu.dimension_semantics<parallel>, #tpu.dimension_semantics<parallel>], iteration_bounds = array<i64: 2, 1>, scalar_prefetch = 0 : i64, scratch_operands = 0 : i64, tpu.core_type = #tpu.core_type<tc>, window_params = [{transform_indices = @transform_0, window_bounds = array<i64: 1, 9, 8, 4>}, {transform_indices = @transform_1, window_bounds = array<i64: 1, 9, 8, 4>}, {transform_indices = @transform_2, window_bounds = array<i64: 1, 9, 8, 4>}, {transform_indices = @transform_3, window_bounds = array<i64: 1, 9, 8, 4>}, {transform_indices = @transform_4, window_bounds = array<i64: 1, 9, 8, 4>}, {transform_indices = @transform_5, window_bounds = array<i64: 1, 9, 8, 4>}, {pipeline_mode = #tpu.pipeline_mode<synchronous>, transform_indices = @transform_6, window_bounds = array<i64: 36, 32>}, {pipeline_mode = #tpu.pipeline_mode<synchronous>, transform_indices = @transform_7, window_bounds = array<i64: 1, 32>}, {pipeline_mode = #tpu.pipeline_mode<synchronous>, transform_indices = @transform_8, window_bounds = array<i64: 32, 128>}, {pipeline_mode = #tpu.pipeline_mode<synchronous>, transform_indices = @transform_9, window_bounds = array<i64: 1, 128>}, {transform_indices = @transform_10, window_bounds = array<i64: 1, 5, 64>}]} {
    %c8_i32 = arith.constant 8 : i32
    %0 = arith.muli %arg1, %c8_i32 : i32
    %c0_i32 = arith.constant 0 : i32
    %1 = arith.addi %0, %c0_i32 : i32
    %c0 = arith.constant 0 : index
    %2 = arith.index_cast %1 : i32 to index
    %c0_0 = arith.constant 0 : index
    %c0_1 = arith.constant 0 : index
    %3 = vector.load %arg2[%c0, %2, %c0_0, %c0_1] : memref<1x9x8x4xf32, #tpu.memory_space<vmem>>, vector<1x8x8x4xf32>
    %4 = vector.shape_cast %3 : vector<1x8x8x4xf32> to vector<8x8x4xf32>
    %5 = vector.shape_cast %4 : vector<8x8x4xf32> to vector<64x4xf32>
    %c0_i32_2 = arith.constant 0 : i32
    %6 = arith.addi %0, %c0_i32_2 : i32
    %c0_3 = arith.constant 0 : index
    %7 = arith.index_cast %6 : i32 to index
    %c0_4 = arith.constant 0 : index
    %c0_5 = arith.constant 0 : index
    %8 = vector.load %arg3[%c0_3, %7, %c0_4, %c0_5] : memref<1x9x8x4xf32, #tpu.memory_space<vmem>>, vector<1x8x8x4xf32>
    %9 = vector.shape_cast %8 : vector<1x8x8x4xf32> to vector<8x8x4xf32>
    %10 = vector.shape_cast %9 : vector<8x8x4xf32> to vector<64x4xf32>
    %c0_i32_6 = arith.constant 0 : i32
    %11 = arith.addi %0, %c0_i32_6 : i32
    %c0_7 = arith.constant 0 : index
    %12 = arith.index_cast %11 : i32 to index
    %c0_8 = arith.constant 0 : index
    %c0_9 = arith.constant 0 : index
    %13 = vector.load %arg4[%c0_7, %12, %c0_8, %c0_9] : memref<1x9x8x4xf32, #tpu.memory_space<vmem>>, vector<1x8x8x4xf32>
    %14 = vector.shape_cast %13 : vector<1x8x8x4xf32> to vector<8x8x4xf32>
    %15 = vector.shape_cast %14 : vector<8x8x4xf32> to vector<64x4xf32>
    %c0_i32_10 = arith.constant 0 : i32
    %16 = arith.addi %0, %c0_i32_10 : i32
    %c0_11 = arith.constant 0 : index
    %17 = arith.index_cast %16 : i32 to index
    %c0_12 = arith.constant 0 : index
    %c0_13 = arith.constant 0 : index
    %18 = vector.load %arg5[%c0_11, %17, %c0_12, %c0_13] : memref<1x9x8x4xf32, #tpu.memory_space<vmem>>, vector<1x8x8x4xf32>
    %19 = vector.shape_cast %18 : vector<1x8x8x4xf32> to vector<8x8x4xf32>
    %20 = vector.shape_cast %19 : vector<8x8x4xf32> to vector<64x4xf32>
    %c0_i32_14 = arith.constant 0 : i32
    %21 = arith.addi %0, %c0_i32_14 : i32
    %c0_15 = arith.constant 0 : index
    %22 = arith.index_cast %21 : i32 to index
    %c0_16 = arith.constant 0 : index
    %c0_17 = arith.constant 0 : index
    %23 = vector.load %arg6[%c0_15, %22, %c0_16, %c0_17] : memref<1x9x8x4xf32, #tpu.memory_space<vmem>>, vector<1x8x8x4xf32>
    %24 = vector.shape_cast %23 : vector<1x8x8x4xf32> to vector<8x8x4xf32>
    %25 = vector.shape_cast %24 : vector<8x8x4xf32> to vector<64x4xf32>
    %c0_i32_18 = arith.constant 0 : i32
    %26 = arith.addi %0, %c0_i32_18 : i32
    %c0_19 = arith.constant 0 : index
    %27 = arith.index_cast %26 : i32 to index
    %c0_20 = arith.constant 0 : index
    %c0_21 = arith.constant 0 : index
    %28 = vector.load %arg7[%c0_19, %27, %c0_20, %c0_21] : memref<1x9x8x4xf32, #tpu.memory_space<vmem>>, vector<1x8x8x4xf32>
    %29 = vector.shape_cast %28 : vector<1x8x8x4xf32> to vector<8x8x4xf32>
    %30 = vector.shape_cast %29 : vector<8x8x4xf32> to vector<64x4xf32>
    %c1_i32 = arith.constant 1 : i32
    %31 = arith.addi %0, %c1_i32 : i32
    %c0_22 = arith.constant 0 : index
    %32 = arith.index_cast %31 : i32 to index
    %c0_23 = arith.constant 0 : index
    %c0_24 = arith.constant 0 : index
    %33 = vector.load %arg2[%c0_22, %32, %c0_23, %c0_24] : memref<1x9x8x4xf32, #tpu.memory_space<vmem>>, vector<1x8x8x4xf32>
    %34 = vector.shape_cast %33 : vector<1x8x8x4xf32> to vector<8x8x4xf32>
    %35 = vector.shape_cast %34 : vector<8x8x4xf32> to vector<64x4xf32>
    %c1_i32_25 = arith.constant 1 : i32
    %36 = arith.addi %0, %c1_i32_25 : i32
    %c0_26 = arith.constant 0 : index
    %37 = arith.index_cast %36 : i32 to index
    %c0_27 = arith.constant 0 : index
    %c0_28 = arith.constant 0 : index
    %38 = vector.load %arg3[%c0_26, %37, %c0_27, %c0_28] : memref<1x9x8x4xf32, #tpu.memory_space<vmem>>, vector<1x8x8x4xf32>
    %39 = vector.shape_cast %38 : vector<1x8x8x4xf32> to vector<8x8x4xf32>
    %40 = vector.shape_cast %39 : vector<8x8x4xf32> to vector<64x4xf32>
    %c1_i32_29 = arith.constant 1 : i32
    %41 = arith.addi %0, %c1_i32_29 : i32
    %c0_30 = arith.constant 0 : index
    %42 = arith.index_cast %41 : i32 to index
    %c0_31 = arith.constant 0 : index
    %c0_32 = arith.constant 0 : index
    %43 = vector.load %arg4[%c0_30, %42, %c0_31, %c0_32] : memref<1x9x8x4xf32, #tpu.memory_space<vmem>>, vector<1x8x8x4xf32>
    %44 = vector.shape_cast %43 : vector<1x8x8x4xf32> to vector<8x8x4xf32>
    %45 = vector.shape_cast %44 : vector<8x8x4xf32> to vector<64x4xf32>
    %46 = tpu.concatenate %5, %10, %15, %20, %25, %30, %35, %40, %45 in 1 : vector<64x4xf32>, vector<64x4xf32>, vector<64x4xf32>, vector<64x4xf32>, vector<64x4xf32>, vector<64x4xf32>, vector<64x4xf32>, vector<64x4xf32>, vector<64x4xf32> -> vector<64x36xf32>
    %47 = arith.truncf %46 : vector<64x36xf32> to vector<64x36xbf16>
    %c0_33 = arith.constant 0 : index
    %c0_34 = arith.constant 0 : index
    %48 = vector.load %arg8[%c0_33, %c0_34] : memref<36x32xbf16, #tpu.memory_space<vmem>>, vector<36x32xbf16>
    %cst = arith.constant dense<0.000000e+00> : vector<64x32xf32>
    %49 = tpu.matmul %47, %48, %cst {dimension_numbers = #tpu.dot_dimension_numbers<[1], [0], [0], [1], [0, 0, 1, 1], [], []>} : vector<64x36xbf16>, vector<36x32xbf16>, vector<64x32xf32> -> vector<64x32xf32>
    %c0_35 = arith.constant 0 : index
    %c0_36 = arith.constant 0 : index
    %50 = vector.load %arg9[%c0_35, %c0_36] : memref<1x32xf32, #tpu.memory_space<vmem>>, vector<1x32xf32>
    %51 = vector.broadcast %50 : vector<1x32xf32> to vector<64x32xf32>
    %52 = arith.addf %49, %51 : vector<64x32xf32>
    %cst_37 = arith.constant 0.000000e+00 : f32
    %53 = vector.broadcast %cst_37 : f32 to vector<64x32xf32>
    %54 = arith.maximumf %52, %53 : vector<64x32xf32>
    %55 = arith.truncf %54 : vector<64x32xf32> to vector<64x32xbf16>
    %c0_38 = arith.constant 0 : index
    %c0_39 = arith.constant 0 : index
    %56 = vector.load %arg10[%c0_38, %c0_39] : memref<32x128xbf16, #tpu.memory_space<vmem>>, vector<32x128xbf16>
    %cst_40 = arith.constant dense<0.000000e+00> : vector<64x128xf32>
    %57 = tpu.matmul %55, %56, %cst_40 {dimension_numbers = #tpu.dot_dimension_numbers<[1], [0], [0], [1], [0, 0, 1, 1], [], []>} : vector<64x32xbf16>, vector<32x128xbf16>, vector<64x128xf32> -> vector<64x128xf32>
    %c0_41 = arith.constant 0 : index
    %c0_42 = arith.constant 0 : index
    %58 = vector.load %arg11[%c0_41, %c0_42] : memref<1x128xf32, #tpu.memory_space<vmem>>, vector<1x128xf32>
    %59 = vector.broadcast %58 : vector<1x128xf32> to vector<64x128xf32>
    %60 = arith.addf %57, %59 : vector<64x128xf32>
    %61 = tpu.transpose %60, [1, 0] : vector<64x128xf32> -> vector<128x64xf32>
    %62 = vector.extract_strided_slice %61 {offsets = [0, 0], sizes = [5, 64], strides = [1, 1]} : vector<128x64xf32> to vector<5x64xf32>
    %63 = arith.truncf %62 : vector<5x64xf32> to vector<5x64xbf16>
    %c0_43 = arith.constant 0 : index
    %c0_44 = arith.constant 0 : index
    %c0_45 = arith.constant 0 : index
    %64 = vector.load %arg12[%c0_43, %c0_44, %c0_45] : memref<1x5x64xbf16, #tpu.memory_space<vmem>>, vector<1x5x64xbf16>
    %65 = vector.shape_cast %64 : vector<1x5x64xbf16> to vector<5x64xbf16>
    %66 = vector.shape_cast %63 : vector<5x64xbf16> to vector<1x5x64xbf16>
    tpu.vector_store %arg12[%c0_43, %c0_44, %c0_45], %66 {strides = array<i32>} : memref<1x5x64xbf16, #tpu.memory_space<vmem>>, vector<1x5x64xbf16>,
    return
  }
  func.func @transform_0(%arg0: i32, %arg1: i32) -> (i32, i32, i32, i32) {
    %c0_i32 = arith.constant 0 : i32
    %c0_i32_0 = arith.constant 0 : i32
    %c0_i32_1 = arith.constant 0 : i32
    %c0_i32_2 = arith.constant 0 : i32
    return %arg0, %c0_i32, %c0_i32_0, %c0_i32_1 : i32, i32, i32, i32
  }
  func.func @transform_1(%arg0: i32, %arg1: i32) -> (i32, i32, i32, i32) {
    %c0_i32 = arith.constant 0 : i32
    %c0_i32_0 = arith.constant 0 : i32
    %c0_i32_1 = arith.constant 0 : i32
    %c0_i32_2 = arith.constant 0 : i32
    return %arg0, %c0_i32, %c0_i32_0, %c0_i32_1 : i32, i32, i32, i32
  }
  func.func @transform_2(%arg0: i32, %arg1: i32) -> (i32, i32, i32, i32) {
    %c0_i32 = arith.constant 0 : i32
    %c0_i32_0 = arith.constant 0 : i32
    %c0_i32_1 = arith.constant 0 : i32
    %c0_i32_2 = arith.constant 0 : i32
    return %arg0, %c0_i32, %c0_i32_0, %c0_i32_1 : i32, i32, i32, i32
  }
  func.func @transform_3(%arg0: i32, %arg1: i32) -> (i32, i32, i32, i32) {
    %c0_i32 = arith.constant 0 : i32
    %c0_i32_0 = arith.constant 0 : i32
    %c0_i32_1 = arith.constant 0 : i32
    %c0_i32_2 = arith.constant 0 : i32
    return %arg0, %c0_i32, %c0_i32_0, %c0_i32_1 : i32, i32, i32, i32
  }
  func.func @transform_4(%arg0: i32, %arg1: i32) -> (i32, i32, i32, i32) {
    %c0_i32 = arith.constant 0 : i32
    %c0_i32_0 = arith.constant 0 : i32
    %c0_i32_1 = arith.constant 0 : i32
    %c0_i32_2 = arith.constant 0 : i32
    return %arg0, %c0_i32, %c0_i32_0, %c0_i32_1 : i32, i32, i32, i32
  }
  func.func @transform_5(%arg0: i32, %arg1: i32) -> (i32, i32, i32, i32) {
    %c0_i32 = arith.constant 0 : i32
    %c0_i32_0 = arith.constant 0 : i32
    %c0_i32_1 = arith.constant 0 : i32
    %c0_i32_2 = arith.constant 0 : i32
    return %arg0, %c0_i32, %c0_i32_0, %c0_i32_1 : i32, i32, i32, i32
  }
  func.func @transform_6(%arg0: i32, %arg1: i32) -> (i32, i32) {
    %c0_i32 = arith.constant 0 : i32
    %c0_i32_0 = arith.constant 0 : i32
    %c0_i32_1 = arith.constant 0 : i32
    return %c0_i32, %c0_i32_0 : i32, i32
  }
  func.func @transform_7(%arg0: i32, %arg1: i32) -> (i32, i32) {
    %c0_i32 = arith.constant 0 : i32
    %c0_i32_0 = arith.constant 0 : i32
    %c0_i32_1 = arith.constant 0 : i32
    return %c0_i32, %c0_i32_0 : i32, i32
  }
  func.func @transform_8(%arg0: i32, %arg1: i32) -> (i32, i32) {
    %c0_i32 = arith.constant 0 : i32
    %c0_i32_0 = arith.constant 0 : i32
    %c0_i32_1 = arith.constant 0 : i32
    return %c0_i32, %c0_i32_0 : i32, i32
  }
  func.func @transform_9(%arg0: i32, %arg1: i32) -> (i32, i32) {
    %c0_i32 = arith.constant 0 : i32
    %c0_i32_0 = arith.constant 0 : i32
    %c0_i32_1 = arith.constant 0 : i32
    return %c0_i32, %c0_i32_0 : i32, i32
  }
  func.func @transform_10(%arg0: i32, %arg1: i32) -> (i32, i32, i32) {
    %c0_i32 = arith.constant 0 : i32
    %c0_i32_0 = arith.constant 0 : i32
    return %arg0, %c0_i32, %arg1 : i32, i32, i32
  }
}

</mosaic_0001>

<llo_original>
// kernel: tpu_custom_call.1
$region0: #{tpu_custom_call.1}
  #allocation0 [shape = 'u32[]', space=smem, size = 0x4, offset = 0x4, fixed_abs, tag = 'smem constant byte address 0x4 - core index']
  #allocation1 [shape = 'u32[144,128]{1,0:T(1,128)}', space=vmem, size = 0x12000, scoped, tag = 'internal scratch']
  %s0 = inlined_call_operand.vmem [shape: f32[2,9,8,4], index: 0, kind: input, shape index: {}]
  %s1 = inlined_call_operand.vmem [shape: f32[2,9,8,4], index: 1, kind: input, shape index: {}]
  %s2 = inlined_call_operand.vmem [shape: f32[2,9,8,4], index: 2, kind: input, shape index: {}]
  %s3 = inlined_call_operand.vmem [shape: f32[2,9,8,4], index: 3, kind: input, shape index: {}]
  %s4 = inlined_call_operand.vmem [shape: f32[2,9,8,4], index: 4, kind: input, shape index: {}]
  %s5 = inlined_call_operand.vmem [shape: f32[2,9,8,4], index: 5, kind: input, shape index: {}]
  %s6 = inlined_call_operand.vmem [shape: bf16[36,32], index: 6, kind: input, shape index: {}]
  %s7 = inlined_call_operand.vmem [shape: f32[1,32], index: 7, kind: input, shape index: {}]
  %s8 = inlined_call_operand.vmem [shape: bf16[32,128], index: 8, kind: input, shape index: {}]
  %s9 = inlined_call_operand.vmem [shape: f32[1,128], index: 9, kind: input, shape index: {}]
  %s10 = inlined_call_operand.vmem [shape: bf16[2,5,64], index: 10, kind: output, shape index: {}]
  %s11 = sld [smem:[#allocation0]]
  $region73: #{tpu_custom_call.1} parent=0
    _
  %s13 = ssub.s32 1, %s11
  %s14 = scalar_select 0, %s13, %s11
  loop: start=0, step=1, limit=4
  $region2: #{tpu_custom_call.1} parent=0 // loop_pre_header
    _
  $region3: #{tpu_custom_call.1} parent=0 // loop_header
    %s16 = sphi 0, %s20
    %p17 = scmp.ge.s32.totalorder %s16, 4
    %s23 = sphi 0, %s35
    %s24 = sphi 0, %s31
    %s25 = sphi 0, %s23
    %s26 = sphi 0, %s24
    %s27 = sphi 0, %s25
    %s28 = sphi 0, %s26
    %s38 = sphi 0, %s40
    %s41 = sphi 0, %s38
    %s42 = sphi 0, %s41
    %s58 = sphi 0, %s42
    %s64 = sphi 0, %s66
    %s67 = sphi 0, %s64
    %s68 = sphi 0, %s67
    %s84 = sphi 0, %s68
    %s90 = sphi 0, %s92
    %s93 = sphi 0, %s90
    %s94 = sphi 0, %s93
    %s110 = sphi 0, %s94
    %s116 = sphi 0, %s118
    %s119 = sphi 0, %s116
    %s120 = sphi 0, %s119
    %s136 = sphi 0, %s120
    %s142 = sphi 0, %s144
    %s145 = sphi 0, %s142
    %s146 = sphi 0, %s145
    %s162 = sphi 0, %s146
    %s168 = sphi 0, %s170
    %s171 = sphi 0, %s168
    %s172 = sphi 0, %s171
    %s188 = sphi 0, %s172
    %s192 = sphi 0, %s192
    %s194 = sphi 0, %s192
    %s195 = sphi 0, %s194
    %s209 = sphi 0, %s195
    %s213 = sphi 0, %s213
    %s215 = sphi 0, %s213
    %s216 = sphi 0, %s215
    %s230 = sphi 0, %s216
    %s234 = sphi 0, %s234
    %s236 = sphi 0, %s234
    %s237 = sphi 0, %s236
    %s251 = sphi 0, %s237
    %s255 = sphi 0, %s255
    %s257 = sphi 0, %s255
    %s258 = sphi 0, %s257
    %s272 = sphi 0, %s258
    %s280 = sphi 0, %s282
    %s283 = sphi 0, %s280
    %s284 = sphi 0, %s283
    %s300 = sphi 0, %s284
  $region4: #{tpu_custom_call.1} parent=0 // loop_header_branch
    %19 = sbr.rel (%p17) target = $region8
  $region5: #{tpu_custom_call.1} parent=0 // loop_body
    %s21 = ssub.s32 %s16, 1
    %s22 = ssub.s32 %s16, 2
    %s29 = sadd.s32 1, %s24
    %p30 = scmp.ge.s32.totalorder %s29, 1
    %s31 = scalar_select %p30, 0, %s29
    %s32 = sadd.s32 1, %s23
    %s33 = scalar_select %p30, %s32, %s23
    %p34 = scmp.ge.s32.totalorder %s33, 2
    %s35 = scalar_select %p34, 0, %s33
    %s36 = ssub.s32 %s23, %s35
    %p37 = scmp.eq.s32.totalorder %s36, 0
    %s39 = sadd.s32 %s38, 1
    %s40 = scalar_select %p37, %s38, %s39
    %p43 = pneg %p37
    %p44 = scmp.eq.s32.totalorder %s16, 1
    %p45 = por %p43, %p44
    %p46 = scmp.ne.s32.totalorder %s38, %s41
    %p47 = scmp.eq.s32.totalorder %s16, 0
    %p48 = por %p46, %p47
    %p49 = scmp.ne.s32.totalorder %s38, %s41
    %p50 = scmp.eq.s32.totalorder %s21, 1
    %p51 = por %p49, %p50
    %p52 = scmp.ne.s32.totalorder %s41, %s42
    %p53 = scmp.eq.s32.totalorder %s21, 0
    %p54 = por %p52, %p53
    %p55 = scmp.ne.s32.totalorder %s41, %s42
    %p56 = scmp.eq.s32.totalorder %s22, 1
    %p57 = por %p55, %p56
    %p59 = scmp.ne.s32.totalorder %s42, %s58
    %p60 = scmp.eq.s32.totalorder %s22, 0
    %p61 = por %p59, %p60
    %s62 = ssub.s32 %s23, %s35
    %p63 = scmp.eq.s32.totalorder %s62, 0
    %s65 = sadd.s32 %s64, 1
    %s66 = scalar_select %p63, %s64, %s65
    %p69 = pneg %p63
    %p70 = scmp.eq.s32.totalorder %s16, 1
    %p71 = por %p69, %p70
    %p72 = scmp.ne.s32.totalorder %s64, %s67
    %p73 = scmp.eq.s32.totalorder %s16, 0
    %p74 = por %p72, %p73
    %p75 = scmp.ne.s32.totalorder %s64, %s67
    %p76 = scmp.eq.s32.totalorder %s21, 1
    %p77 = por %p75, %p76
    %p78 = scmp.ne.s32.totalorder %s67, %s68
    %p79 = scmp.eq.s32.totalorder %s21, 0
    %p80 = por %p78, %p79
    %p81 = scmp.ne.s32.totalorder %s67, %s68
    %p82 = scmp.eq.s32.totalorder %s22, 1
    %p83 = por %p81, %p82
    %p85 = scmp.ne.s32.totalorder %s68, %s84
    %p86 = scmp.eq.s32.totalorder %s22, 0
    %p87 = por %p85, %p86
    %s88 = ssub.s32 %s23, %s35
    %p89 = scmp.eq.s32.totalorder %s88, 0
    %s91 = sadd.s32 %s90, 1
    %s92 = scalar_select %p89, %s90, %s91
    %p95 = pneg %p89
    %p96 = scmp.eq.s32.totalorder %s16, 1
    %p97 = por %p95, %p96
    %p98 = scmp.ne.s32.totalorder %s90, %s93
    %p99 = scmp.eq.s32.totalorder %s16, 0
    %p100 = por %p98, %p99
    %p101 = scmp.ne.s32.totalorder %s90, %s93
    %p102 = scmp.eq.s32.totalorder %s21, 1
    %p103 = por %p101, %p102
    %p104 = scmp.ne.s32.totalorder %s93, %s94
    %p105 = scmp.eq.s32.totalorder %s21, 0
    %p106 = por %p104, %p105
    %p107 = scmp.ne.s32.totalorder %s93, %s94
    %p108 = scmp.eq.s32.totalorder %s22, 1
    %p109 = por %p107, %p108
    %p111 = scmp.ne.s32.totalorder %s94, %s110
    %p112 = scmp.eq.s32.totalorder %s22, 0
    %p113 = por %p111, %p112
    %s114 = ssub.s32 %s23, %s35
    %p115 = scmp.eq.s32.totalorder %s114, 0
    %s117 = sadd.s32 %s116, 1
    %s118 = scalar_select %p115, %s116, %s117
    %p121 = pneg %p115
    %p122 = scmp.eq.s32.totalorder %s16, 1
    %p123 = por %p121, %p122
    %p124 = scmp.ne.s32.totalorder %s116, %s119
    %p125 = scmp.eq.s32.totalorder %s16, 0
    %p126 = por %p124, %p125
    %p127 = scmp.ne.s32.totalorder %s116, %s119
    %p128 = scmp.eq.s32.totalorder %s21, 1
    %p129 = por %p127, %p128
    %p130 = scmp.ne.s32.totalorder %s119, %s120
    %p131 = scmp.eq.s32.totalorder %s21, 0
    %p132 = por %p130, %p131
    %p133 = scmp.ne.s32.totalorder %s119, %s120
    %p134 = scmp.eq.s32.totalorder %s22, 1
    %p135 = por %p133, %p134
    %p137 = scmp.ne.s32.totalorder %s120, %s136
    %p138 = scmp.eq.s32.totalorder %s22, 0
    %p139 = por %p137, %p138
    %s140 = ssub.s32 %s23, %s35
    %p141 = scmp.eq.s32.totalorder %s140, 0
    %s143 = sadd.s32 %s142, 1
    %s144 = scalar_select %p141, %s142, %s143
    %p147 = pneg %p141
    %p148 = scmp.eq.s32.totalorder %s16, 1
    %p149 = por %p147, %p148
    %p150 = scmp.ne.s32.totalorder %s142, %s145
    %p151 = scmp.eq.s32.totalorder %s16, 0
    %p152 = por %p150, %p151
    %p153 = scmp.ne.s32.totalorder %s142, %s145
    %p154 = scmp.eq.s32.totalorder %s21, 1
    %p155 = por %p153, %p154
    %p156 = scmp.ne.s32.totalorder %s145, %s146
    %p157 = scmp.eq.s32.totalorder %s21, 0
    %p158 = por %p156, %p157
    %p159 = scmp.ne.s32.totalorder %s145, %s146
    %p160 = scmp.eq.s32.totalorder %s22, 1
    %p161 = por %p159, %p160
    %p163 = scmp.ne.s32.totalorder %s146, %s162
    %p164 = scmp.eq.s32.totalorder %s22, 0
    %p165 = por %p163, %p164
    %s166 = ssub.s32 %s23, %s35
    %p167 = scmp.eq.s32.totalorder %s166, 0
    %s169 = sadd.s32 %s168, 1
    %s170 = scalar_select %p167, %s168, %s169
    %p173 = pneg %p167
    %p174 = scmp.eq.s32.totalorder %s16, 1
    %p175 = por %p173, %p174
    %p176 = scmp.ne.s32.totalorder %s168, %s171
    %p177 = scmp.eq.s32.totalorder %s16, 0
    %p178 = por %p176, %p177
    %p179 = scmp.ne.s32.totalorder %s168, %s171
    %p180 = scmp.eq.s32.totalorder %s21, 1
    %p181 = por %p179, %p180
    %p182 = scmp.ne.s32.totalorder %s171, %s172
    %p183 = scmp.eq.s32.totalorder %s21, 0
    %p184 = por %p182, %p183
    %p185 = scmp.ne.s32.totalorder %s171, %s172
    %p186 = scmp.eq.s32.totalorder %s22, 1
    %p187 = por %p185, %p186
    %p189 = scmp.ne.s32.totalorder %s172, %s188
    %p190 = scmp.eq.s32.totalorder %s22, 0
    %p191 = por %p189, %p190
    %s193 = sadd.s32 %s192, 1
    %p196 = scmp.eq.s32.totalorder %s16, 1
    %p197 = scmp.ne.s32.totalorder %s192, %s194
    %p198 = scmp.eq.s32.totalorder %s16, 0
    %p199 = por %p197, %p198
    %p200 = scmp.ne.s32.totalorder %s192, %s194
    %p201 = scmp.eq.s32.totalorder %s21, 1
    %p202 = por %p200, %p201
    %p203 = scmp.ne.s32.totalorder %s194, %s195
    %p204 = scmp.eq.s32.totalorder %s21, 0
    %p205 = por %p203, %p204
    %p206 = scmp.ne.s32.totalorder %s194, %s195
    %p207 = scmp.eq.s32.totalorder %s22, 1
    %p208 = por %p206, %p207
    %p210 = scmp.ne.s32.totalorder %s195, %s209
    %p211 = scmp.eq.s32.totalorder %s22, 0
    %p212 = por %p210, %p211
    %s214 = sadd.s32 %s213, 1
    %p217 = scmp.eq.s32.totalorder %s16, 1
    %p218 = scmp.ne.s32.totalorder %s213, %s215
    %p219 = scmp.eq.s32.totalorder %s16, 0
    %p220 = por %p218, %p219
    %p221 = scmp.ne.s32.totalorder %s213, %s215
    %p222 = scmp.eq.s32.totalorder %s21, 1
    %p223 = por %p221, %p222
    %p224 = scmp.ne.s32.totalorder %s215, %s216
    %p225 = scmp.eq.s32.totalorder %s21, 0
    %p226 = por %p224, %p225
    %p227 = scmp.ne.s32.totalorder %s215, %s216
    %p228 = scmp.eq.s32.totalorder %s22, 1
    %p229 = por %p227, %p228
    %p231 = scmp.ne.s32.totalorder %s216, %s230
    %p232 = scmp.eq.s32.totalorder %s22, 0
    %p233 = por %p231, %p232
    %s235 = sadd.s32 %s234, 1
    %p238 = scmp.eq.s32.totalorder %s16, 1
    %p239 = scmp.ne.s32.totalorder %s234, %s236
    %p240 = scmp.eq.s32.totalorder %s16, 0
    %p241 = por %p239, %p240
    %p242 = scmp.ne.s32.totalorder %s234, %s236
    %p243 = scmp.eq.s32.totalorder %s21, 1
    %p244 = por %p242, %p243
    %p245 = scmp.ne.s32.totalorder %s236, %s237
    %p246 = scmp.eq.s32.totalorder %s21, 0
    %p247 = por %p245, %p246
    %p248 = scmp.ne.s32.totalorder %s236, %s237
    %p249 = scmp.eq.s32.totalorder %s22, 1
    %p250 = por %p248, %p249
    %p252 = scmp.ne.s32.totalorder %s237, %s251
    %p253 = scmp.eq.s32.totalorder %s22, 0
    %p254 = por %p252, %p253
    %s256 = sadd.s32 %s255, 1
    %p259 = scmp.eq.s32.totalorder %s16, 1
    %p260 = scmp.ne.s32.totalorder %s255, %s257
    %p261 = scmp.eq.s32.totalorder %s16, 0
    %p262 = por %p260, %p261
    %p263 = scmp.ne.s32.totalorder %s255, %s257
    %p264 = scmp.eq.s32.totalorder %s21, 1
    %p265 = por %p263, %p264
    %p266 = scmp.ne.s32.totalorder %s257, %s258
    %p267 = scmp.eq.s32.totalorder %s21, 0
    %p268 = por %p266, %p267
    %p269 = scmp.ne.s32.totalorder %s257, %s258
    %p270 = scmp.eq.s32.totalorder %s22, 1
    %p271 = por %p269, %p270
    %p273 = scmp.ne.s32.totalorder %s258, %s272
    %p274 = scmp.eq.s32.totalorder %s22, 0
    %p275 = por %p273, %p274
    %s276 = ssub.s32 %s23, %s35
    %s277 = ssub.s32 %s24, %s31
    %s278 = sor.u32 %s276, %s277
    %p279 = scmp.eq.s32.totalorder %s278, 0
    %s281 = sadd.s32 %s280, 1
    %s282 = scalar_select %p279, %s280, %s281
    %p285 = pneg %p279
    %p286 = scmp.eq.s32.totalorder %s16, 1
    %p287 = por %p285, %p286
    %p288 = scmp.ne.s32.totalorder %s280, %s283
    %p289 = scmp.eq.s32.totalorder %s16, 0
    %p290 = por %p288, %p289
    %p291 = scmp.ne.s32.totalorder %s280, %s283
    %p292 = scmp.eq.s32.totalorder %s21, 1
    %p293 = por %p291, %p292
    %p294 = scmp.ne.s32.totalorder %s283, %s284
    %p295 = scmp.eq.s32.totalorder %s21, 0
    %p296 = por %p294, %p295
    %p297 = scmp.ne.s32.totalorder %s283, %s284
    %p298 = scmp.eq.s32.totalorder %s22, 1
    %p299 = por %p297, %p298
    %p301 = scmp.ne.s32.totalorder %s284, %s300
    %p302 = scmp.eq.s32.totalorder %s22, 0
    %p303 = por %p301, %p302
    %p304 = scmp.le.s32.totalorder 1, %s16
    %p305 = scmp.lt.s32.totalorder %s16, 3
    %p306 = pnand %p304, %p305
    %p307 = pneg %p306
    // Predicated region
    $region9: #{tpu_custom_call.1} parent=5 // pred_check
      _
    $region10: #{tpu_custom_call.1} parent=5 // pred_check_branch
      %309 = sbr.rel (%p306) target = $region12
    $region11: #{tpu_custom_call.1} parent=5 // pred_region
      %s310 = ssub.s32 %s16, 1
      // Predicated region
      $region13: #{tpu_custom_call.1} parent=11 // pred_check
        %p311 = pneg %p205
      $region14: #{tpu_custom_call.1} parent=11 // pred_check_branch
        %313 = sbr.rel (%p311) target = $region16
      $region15: #{tpu_custom_call.1} parent=11 // pred_region
        _
      $region16: #{tpu_custom_call.1} parent=11 // pred_fallthru
        _
      // Predicated region
      $region17: #{tpu_custom_call.1} parent=11 // pred_check
        %p314 = pneg %p226
      $region18: #{tpu_custom_call.1} parent=11 // pred_check_branch
        %316 = sbr.rel (%p314) target = $region20
      $region19: #{tpu_custom_call.1} parent=11 // pred_region
        _
      $region20: #{tpu_custom_call.1} parent=11 // pred_fallthru
        _
      // Predicated region
      $region21: #{tpu_custom_call.1} parent=11 // pred_check
        %p317 = pneg %p247
      $region22: #{tpu_custom_call.1} parent=11 // pred_check_branch
        %319 = sbr.rel (%p317) target = $region24
      $region23: #{tpu_custom_call.1} parent=11 // pred_region
        _
      $region24: #{tpu_custom_call.1} parent=11 // pred_fallthru
        _
      // Predicated region
      $region25: #{tpu_custom_call.1} parent=11 // pred_check
        %p320 = pneg %p268
      $region26: #{tpu_custom_call.1} parent=11 // pred_check_branch
        %322 = sbr.rel (%p320) target = $region28
      $region27: #{tpu_custom_call.1} parent=11 // pred_region
        _
      $region28: #{tpu_custom_call.1} parent=11 // pred_fallthru
        _
    $region12: #{tpu_custom_call.1} parent=5 // pred_fallthru
      _
    %p323 = scmp.lt.s32.totalorder %s16, 2
    // Predicated region
    $region29: #{tpu_custom_call.1} parent=5 // pred_check
      %p324 = pneg %p323
    $region30: #{tpu_custom_call.1} parent=5 // pred_check_branch
      %326 = sbr.rel (%p324) target = $region32
    $region31: #{tpu_custom_call.1} parent=5 // pred_region
      // Predicated region
      $region33: #{tpu_custom_call.1} parent=31 // pred_check
        %p327 = pneg %p48
      $region34: #{tpu_custom_call.1} parent=31 // pred_check_branch
        %329 = sbr.rel (%p327) target = $region36
      $region35: #{tpu_custom_call.1} parent=31 // pred_region
        %p330 = scmp.lt.s32.totalorder %s23, 1
        %s331 = scalar_select %p330, %s23, 1
        %s332 = smul.addr %s331, 9
        %s333 = smul.addr %s332, 8
        %s334 = scalar_lea.vmem %s0, %s333
      $region36: #{tpu_custom_call.1} parent=31 // pred_fallthru
        _
      // Predicated region
      $region37: #{tpu_custom_call.1} parent=31 // pred_check
        %p335 = pneg %p74
      $region38: #{tpu_custom_call.1} parent=31 // pred_check_branch
        %337 = sbr.rel (%p335) target = $region40
      $region39: #{tpu_custom_call.1} parent=31 // pred_region
        %p338 = scmp.lt.s32.totalorder %s23, 1
        %s339 = scalar_select %p338, %s23, 1
        %s340 = smul.addr %s339, 9
        %s341 = smul.addr %s340, 8
        %s342 = scalar_lea.vmem %s1, %s341
      $region40: #{tpu_custom_call.1} parent=31 // pred_fallthru
        _
      // Predicated region
      $region41: #{tpu_custom_call.1} parent=31 // pred_check
        %p343 = pneg %p100
      $region42: #{tpu_custom_call.1} parent=31 // pred_check_branch
        %345 = sbr.rel (%p343) target = $region44
      $region43: #{tpu_custom_call.1} parent=31 // pred_region
        %p346 = scmp.lt.s32.totalorder %s23, 1
        %s347 = scalar_select %p346, %s23, 1
        %s348 = smul.addr %s347, 9
        %s349 = smul.addr %s348, 8
        %s350 = scalar_lea.vmem %s2, %s349
      $region44: #{tpu_custom_call.1} parent=31 // pred_fallthru
        _
      // Predicated region
      $region45: #{tpu_custom_call.1} parent=31 // pred_check
        %p351 = pneg %p126
      $region46: #{tpu_custom_call.1} parent=31 // pred_check_branch
        %353 = sbr.rel (%p351) target = $region48
      $region47: #{tpu_custom_call.1} parent=31 // pred_region
        %p354 = scmp.lt.s32.totalorder %s23, 1
        %s355 = scalar_select %p354, %s23, 1
        %s356 = smul.addr %s355, 9
        %s357 = smul.addr %s356, 8
        %s358 = scalar_lea.vmem %s3, %s357
      $region48: #{tpu_custom_call.1} parent=31 // pred_fallthru
        _
      // Predicated region
      $region49: #{tpu_custom_call.1} parent=31 // pred_check
        %p359 = pneg %p152
      $region50: #{tpu_custom_call.1} parent=31 // pred_check_branch
        %361 = sbr.rel (%p359) target = $region52
      $region51: #{tpu_custom_call.1} parent=31 // pred_region
        %p362 = scmp.lt.s32.totalorder %s23, 1
        %s363 = scalar_select %p362, %s23, 1
        %s364 = smul.addr %s363, 9
        %s365 = smul.addr %s364, 8
        %s366 = scalar_lea.vmem %s4, %s365
      $region52: #{tpu_custom_call.1} parent=31 // pred_fallthru
        _
      // Predicated region
      $region53: #{tpu_custom_call.1} parent=31 // pred_check
        %p367 = pneg %p178
      $region54: #{tpu_custom_call.1} parent=31 // pred_check_branch
        %369 = sbr.rel (%p367) target = $region56
      $region55: #{tpu_custom_call.1} parent=31 // pred_region
        %p370 = scmp.lt.s32.totalorder %s23, 1
        %s371 = scalar_select %p370, %s23, 1
        %s372 = smul.addr %s371, 9
        %s373 = smul.addr %s372, 8
        %s374 = scalar_lea.vmem %s5, %s373
      $region56: #{tpu_custom_call.1} parent=31 // pred_fallthru
        _
    $region32: #{tpu_custom_call.1} parent=5 // pred_fallthru
      _
    %p375 = scmp.le.s32.totalorder 1, %s16
    %p376 = scmp.lt.s32.totalorder %s16, 3
    %p377 = pnand %p375, %p376
    %p378 = pneg %p377
    // Predicated region
    $region57: #{tpu_custom_call.1} parent=5 // pred_check
      _
    $region58: #{tpu_custom_call.1} parent=5 // pred_check_branch
      %380 = sbr.rel (%p377) target = $region60
    $region59: #{tpu_custom_call.1} parent=5 // pred_region
      %s381 = ssub.s32 %s16, 1
      %p382 = scmp.lt.s32.totalorder %s25, 1
      %s383 = scalar_select %p382, %s25, 1
      %s384 = smul.addr %s383, 9
      %s385 = smul.addr %s384, 8
      %s386 = scalar_lea.vmem %s0, %s385
      %p387 = pneg %p54
      %p388 = pneg %p51
      %p389 = scmp.lt.s32.totalorder %s25, 1
      %s390 = scalar_select %p389, %s25, 1
      %s391 = smul.addr %s390, 9
      %s392 = smul.addr %s391, 8
      %s393 = scalar_lea.vmem %s1, %s392
      %p394 = pneg %p80
      %p395 = pneg %p77
      %p396 = scmp.lt.s32.totalorder %s25, 1
      %s397 = scalar_select %p396, %s25, 1
      %s398 = smul.addr %s397, 9
      %s399 = smul.addr %s398, 8
      %s400 = scalar_lea.vmem %s2, %s399
      %p401 = pneg %p106
      %p402 = pneg %p103
      %p403 = scmp.lt.s32.totalorder %s25, 1
      %s404 = scalar_select %p403, %s25, 1
      %s405 = smul.addr %s404, 9
      %s406 = smul.addr %s405, 8
      %s407 = scalar_lea.vmem %s3, %s406
      %p408 = pneg %p132
      %p409 = pneg %p129
      %p410 = scmp.lt.s32.totalorder %s25, 1
      %s411 = scalar_select %p410, %s25, 1
      %s412 = smul.addr %s411, 9
      %s413 = smul.addr %s412, 8
      %s414 = scalar_lea.vmem %s4, %s413
      %p415 = pneg %p158
      %p416 = pneg %p155
      %p417 = scmp.lt.s32.totalorder %s25, 1
      %s418 = scalar_select %p417, %s25, 1
      %s419 = smul.addr %s418, 9
      %s420 = smul.addr %s419, 8
      %s421 = scalar_lea.vmem %s5, %s420
      %p422 = pneg %p184
      %p423 = pneg %p181
      %p424 = pneg %p205
      %p425 = pneg %p202
      %p426 = pneg %p226
      %p427 = pneg %p223
      %p428 = pneg %p247
      %p429 = pneg %p244
      %p430 = pneg %p268
      %p431 = pneg %p265
      %p432 = pneg %p296
      %p433 = pneg %p293
      %p434 = scmp.lt.s32.totalorder %s25, 1
      %s435 = scalar_select %p434, %s25, 1
      %p436 = scmp.lt.s32.totalorder %s26, 0
      %s437 = scalar_select %p436, %s26, 0
      %s438 = sadd.s32 %s437, %s435
      %s439 = smul.addr %s438, 4
      %s440 = scalar_lea.vmem %s10, %s439
      %p441 = scmp.lt.s32.totalorder %s25, 1
      %s442 = scalar_select %p441, %s25, 1
      %s443 = smul.addr %s442, 9
      %s444 = smul.addr %s443, 8
      %s445 = scalar_lea.vmem %s0, %s444
      %p446 = scmp.lt.s32.totalorder %s25, 1
      %s447 = scalar_select %p446, %s25, 1
      %s448 = smul.addr %s447, 9
      %s449 = smul.addr %s448, 8
      %s450 = scalar_lea.vmem %s1, %s449
      %p451 = scmp.lt.s32.totalorder %s25, 1
      %s452 = scalar_select %p451, %s25, 1
      %s453 = smul.addr %s452, 9
      %s454 = smul.addr %s453, 8
      %s455 = scalar_lea.vmem %s2, %s454
      %p456 = scmp.lt.s32.totalorder %s25, 1
      %s457 = scalar_select %p456, %s25, 1
      %s458 = smul.addr %s457, 9
      %s459 = smul.addr %s458, 8
      %s460 = scalar_lea.vmem %s3, %s459
      %p461 = scmp.lt.s32.totalorder %s25, 1
      %s462 = scalar_select %p461, %s25, 1
      %s463 = smul.addr %s462, 9
      %s464 = smul.addr %s463, 8
      %s465 = scalar_lea.vmem %s4, %s464
      %p466 = scmp.lt.s32.totalorder %s25, 1
      %s467 = scalar_select %p466, %s25, 1
      %s468 = smul.addr %s467, 9
      %s469 = smul.addr %s468, 8
      %s470 = scalar_lea.vmem %s5, %s469
      %p471 = scmp.lt.s32.totalorder %s25, 1
      %s472 = scalar_select %p471, %s25, 1
      %p473 = scmp.lt.s32.totalorder %s26, 0
      %s474 = scalar_select %p473, %s26, 0
      %s475 = sadd.s32 %s474, %s472
      %s476 = smul.addr %s475, 4
      %s477 = scalar_lea.vmem %s10, %s476
      %s479 = smul.u32 %s26, 8
      %s480 = smul.u32 %s479, 8
      %s481 = scalar_lea.vmem %s445, %s480
      %v482 = vld [vmem:[%s481] sm:$0xff]
      %v483 = vld [vmem:[%s481 + $0x8] sm:$0xff]
      %v484 = vld [vmem:[%s481 + $0x10] sm:$0xff]
      %v485 = vld [vmem:[%s481 + $0x18] sm:$0xff]
      %v486 = vld [vmem:[%s481 + $0x20] sm:$0xff]
      %v487 = vld [vmem:[%s481 + $0x28] sm:$0xff]
      %v488 = vld [vmem:[%s481 + $0x30] sm:$0xff]
      %v489 = vld [vmem:[%s481 + $0x38] sm:$0xff]
      %s490 = scalar_lea.vmem %s450, %s480
      %v491 = vld [vmem:[%s490] sm:$0xff]
      %v492 = vld [vmem:[%s490 + $0x8] sm:$0xff]
      %v493 = vld [vmem:[%s490 + $0x10] sm:$0xff]
      %v494 = vld [vmem:[%s490 + $0x18] sm:$0xff]
      %v495 = vld [vmem:[%s490 + $0x20] sm:$0xff]
      %v496 = vld [vmem:[%s490 + $0x28] sm:$0xff]
      %v497 = vld [vmem:[%s490 + $0x30] sm:$0xff]
      %v498 = vld [vmem:[%s490 + $0x38] sm:$0xff]
      %s499 = scalar_lea.vmem %s455, %s480
      %v500 = vld [vmem:[%s499] sm:$0xff]
      %v501 = vld [vmem:[%s499 + $0x8] sm:$0xff]
      %v502 = vld [vmem:[%s499 + $0x10] sm:$0xff]
      %v503 = vld [vmem:[%s499 + $0x18] sm:$0xff]
      %v504 = vld [vmem:[%s499 + $0x20] sm:$0xff]
      %v505 = vld [vmem:[%s499 + $0x28] sm:$0xff]
      %v506 = vld [vmem:[%s499 + $0x30] sm:$0xff]
      %v507 = vld [vmem:[%s499 + $0x38] sm:$0xff]
      %s508 = scalar_lea.vmem %s460, %s480
      %v509 = vld [vmem:[%s508] sm:$0xff]
      %v510 = vld [vmem:[%s508 + $0x8] sm:$0xff]
      %v511 = vld [vmem:[%s508 + $0x10] sm:$0xff]
      %v512 = vld [vmem:[%s508 + $0x18] sm:$0xff]
      %v513 = vld [vmem:[%s508 + $0x20] sm:$0xff]
      %v514 = vld [vmem:[%s508 + $0x28] sm:$0xff]
      %v515 = vld [vmem:[%s508 + $0x30] sm:$0xff]
      %v516 = vld [vmem:[%s508 + $0x38] sm:$0xff]
      %s517 = scalar_lea.vmem %s465, %s480
      %v518 = vld [vmem:[%s517] sm:$0xff]
      %v519 = vld [vmem:[%s517 + $0x8] sm:$0xff]
      %v520 = vld [vmem:[%s517 + $0x10] sm:$0xff]
      %v521 = vld [vmem:[%s517 + $0x18] sm:$0xff]
      %v522 = vld [vmem:[%s517 + $0x20] sm:$0xff]
      %v523 = vld [vmem:[%s517 + $0x28] sm:$0xff]
      %v524 = vld [vmem:[%s517 + $0x30] sm:$0xff]
      %v525 = vld [vmem:[%s517 + $0x38] sm:$0xff]
      %s526 = scalar_lea.vmem %s470, %s480
      %v527 = vld [vmem:[%s526] sm:$0xff]
      %v528 = vld [vmem:[%s526 + $0x8] sm:$0xff]
      %v529 = vld [vmem:[%s526 + $0x10] sm:$0xff]
      %v530 = vld [vmem:[%s526 + $0x18] sm:$0xff]
      %v531 = vld [vmem:[%s526 + $0x20] sm:$0xff]
      %v532 = vld [vmem:[%s526 + $0x28] sm:$0xff]
      %v533 = vld [vmem:[%s526 + $0x30] sm:$0xff]
      %v534 = vld [vmem:[%s526 + $0x38] sm:$0xff]
      %s535 = sadd.s32 %s479, 1
      %s536 = smul.u32 %s535, 8
      %s537 = scalar_lea.vmem %s445, %s536
      %v538 = vld [vmem:[%s537] sm:$0xff]
      %v539 = vld [vmem:[%s537 + $0x8] sm:$0xff]
      %v540 = vld [vmem:[%s537 + $0x10] sm:$0xff]
      %v541 = vld [vmem:[%s537 + $0x18] sm:$0xff]
      %v542 = vld [vmem:[%s537 + $0x20] sm:$0xff]
      %v543 = vld [vmem:[%s537 + $0x28] sm:$0xff]
      %v544 = vld [vmem:[%s537 + $0x30] sm:$0xff]
      %v545 = vld [vmem:[%s537 + $0x38] sm:$0xff]
      %s546 = scalar_lea.vmem %s450, %s536
      %v547 = vld [vmem:[%s546] sm:$0xff]
      %v548 = vld [vmem:[%s546 + $0x8] sm:$0xff]
      %v549 = vld [vmem:[%s546 + $0x10] sm:$0xff]
      %v550 = vld [vmem:[%s546 + $0x18] sm:$0xff]
      %v551 = vld [vmem:[%s546 + $0x20] sm:$0xff]
      %v552 = vld [vmem:[%s546 + $0x28] sm:$0xff]
      %v553 = vld [vmem:[%s546 + $0x30] sm:$0xff]
      %v554 = vld [vmem:[%s546 + $0x38] sm:$0xff]
      %s555 = scalar_lea.vmem %s455, %s536
      %v556 = vld [vmem:[%s555] sm:$0xff]
      %v557 = vld [vmem:[%s555 + $0x8] sm:$0xff]
      %v558 = vld [vmem:[%s555 + $0x10] sm:$0xff]
      %v559 = vld [vmem:[%s555 + $0x18] sm:$0xff]
      %v560 = vld [vmem:[%s555 + $0x20] sm:$0xff]
      %v561 = vld [vmem:[%s555 + $0x28] sm:$0xff]
      %v562 = vld [vmem:[%s555 + $0x30] sm:$0xff]
      %v563 = vld [vmem:[%s555 + $0x38] sm:$0xff]
      %572 = vrot.lane.b32.xlu0 %v491, 4
      %v573 = vpop.permute.xlu0 %572
      %574 = vrot.lane.b32.xlu0 %v492, 4
      %v575 = vpop.permute.xlu0 %574
      %576 = vrot.lane.b32.xlu0 %v493, 4
      %v577 = vpop.permute.xlu0 %576
      %578 = vrot.lane.b32.xlu0 %v494, 4
      %v579 = vpop.permute.xlu0 %578
      %580 = vrot.lane.b32.xlu0 %v495, 4
      %v581 = vpop.permute.xlu0 %580
      %582 = vrot.lane.b32.xlu0 %v496, 4
      %v583 = vpop.permute.xlu0 %582
      %584 = vrot.lane.b32.xlu0 %v497, 4
      %v585 = vpop.permute.xlu0 %584
      %586 = vrot.lane.b32.xlu0 %v498, 4
      %v587 = vpop.permute.xlu0 %586
      %604 = vrot.lane.b32.xlu0 %v500, 8
      %v605 = vpop.permute.xlu0 %604
      %606 = vrot.lane.b32.xlu0 %v501, 8
      %v607 = vpop.permute.xlu0 %606
      %608 = vrot.lane.b32.xlu0 %v502, 8
      %v609 = vpop.permute.xlu0 %608
      %610 = vrot.lane.b32.xlu0 %v503, 8
      %v611 = vpop.permute.xlu0 %610
      %612 = vrot.lane.b32.xlu0 %v504, 8
      %v613 = vpop.permute.xlu0 %612
      %614 = vrot.lane.b32.xlu0 %v505, 8
      %v615 = vpop.permute.xlu0 %614
      %616 = vrot.lane.b32.xlu0 %v506, 8
      %v617 = vpop.permute.xlu0 %616
      %618 = vrot.lane.b32.xlu0 %v507, 8
      %v619 = vpop.permute.xlu0 %618
      %636 = vrot.lane.b32.xlu0 %v509, 12
      %v637 = vpop.permute.xlu0 %636
      %638 = vrot.lane.b32.xlu0 %v510, 12
      %v639 = vpop.permute.xlu0 %638
      %640 = vrot.lane.b32.xlu0 %v511, 12
      %v641 = vpop.permute.xlu0 %640
      %642 = vrot.lane.b32.xlu0 %v512, 12
      %v643 = vpop.permute.xlu0 %642
      %644 = vrot.lane.b32.xlu0 %v513, 12
      %v645 = vpop.permute.xlu0 %644
      %646 = vrot.lane.b32.xlu0 %v514, 12
      %v647 = vpop.permute.xlu0 %646
      %648 = vrot.lane.b32.xlu0 %v515, 12
      %v649 = vpop.permute.xlu0 %648
      %650 = vrot.lane.b32.xlu0 %v516, 12
      %v651 = vpop.permute.xlu0 %650
      %668 = vrot.lane.b32.xlu0 %v518, 16
      %v669 = vpop.permute.xlu0 %668
      %670 = vrot.lane.b32.xlu0 %v519, 16
      %v671 = vpop.permute.xlu0 %670
      %672 = vrot.lane.b32.xlu0 %v520, 16
      %v673 = vpop.permute.xlu0 %672
      %674 = vrot.lane.b32.xlu0 %v521, 16
      %v675 = vpop.permute.xlu0 %674
      %676 = vrot.lane.b32.xlu0 %v522, 16
      %v677 = vpop.permute.xlu0 %676
      %678 = vrot.lane.b32.xlu0 %v523, 16
      %v679 = vpop.permute.xlu0 %678
      %680 = vrot.lane.b32.xlu0 %v524, 16
      %v681 = vpop.permute.xlu0 %680
      %682 = vrot.lane.b32.xlu0 %v525, 16
      %v683 = vpop.permute.xlu0 %682
      %700 = vrot.lane.b32.xlu0 %v527, 20
      %v701 = vpop.permute.xlu0 %700
      %702 = vrot.lane.b32.xlu0 %v528, 20
      %v703 = vpop.permute.xlu0 %702
      %704 = vrot.lane.b32.xlu0 %v529, 20
      %v705 = vpop.permute.xlu0 %704
      %706 = vrot.lane.b32.xlu0 %v530, 20
      %v707 = vpop.permute.xlu0 %706
      %708 = vrot.lane.b32.xlu0 %v531, 20
      %v709 = vpop.permute.xlu0 %708
      %710 = vrot.lane.b32.xlu0 %v532, 20
      %v711 = vpop.permute.xlu0 %710
      %712 = vrot.lane.b32.xlu0 %v533, 20
      %v713 = vpop.permute.xlu0 %712
      %714 = vrot.lane.b32.xlu0 %v534, 20
      %v715 = vpop.permute.xlu0 %714
      %732 = vrot.lane.b32.xlu0 %v538, 24
      %v733 = vpop.permute.xlu0 %732
      %734 = vrot.lane.b32.xlu0 %v539, 24
      %v735 = vpop.permute.xlu0 %734
      %736 = vrot.lane.b32.xlu0 %v540, 24
      %v737 = vpop.permute.xlu0 %736
      %738 = vrot.lane.b32.xlu0 %v541, 24
      %v739 = vpop.permute.xlu0 %738
      %740 = vrot.lane.b32.xlu0 %v542, 24
      %v741 = vpop.permute.xlu0 %740
      %742 = vrot.lane.b32.xlu0 %v543, 24
      %v743 = vpop.permute.xlu0 %742
      %744 = vrot.lane.b32.xlu0 %v544, 24
      %v745 = vpop.permute.xlu0 %744
      %746 = vrot.lane.b32.xlu0 %v545, 24
      %v747 = vpop.permute.xlu0 %746
      %764 = vrot.lane.b32.xlu0 %v547, 28
      %v765 = vpop.permute.xlu0 %764
      %766 = vrot.lane.b32.xlu0 %v548, 28
      %v767 = vpop.permute.xlu0 %766
      %768 = vrot.lane.b32.xlu0 %v549, 28
      %v769 = vpop.permute.xlu0 %768
      %770 = vrot.lane.b32.xlu0 %v550, 28
      %v771 = vpop.permute.xlu0 %770
      %772 = vrot.lane.b32.xlu0 %v551, 28
      %v773 = vpop.permute.xlu0 %772
      %774 = vrot.lane.b32.xlu0 %v552, 28
      %v775 = vpop.permute.xlu0 %774
      %776 = vrot.lane.b32.xlu0 %v553, 28
      %v777 = vpop.permute.xlu0 %776
      %778 = vrot.lane.b32.xlu0 %v554, 28
      %v779 = vpop.permute.xlu0 %778
      %796 = vrot.lane.b32.xlu0 %v556, 32
      %v797 = vpop.permute.xlu0 %796
      %798 = vrot.lane.b32.xlu0 %v557, 32
      %v799 = vpop.permute.xlu0 %798
      %800 = vrot.lane.b32.xlu0 %v558, 32
      %v801 = vpop.permute.xlu0 %800
      %802 = vrot.lane.b32.xlu0 %v559, 32
      %v803 = vpop.permute.xlu0 %802
      %804 = vrot.lane.b32.xlu0 %v560, 32
      %v805 = vpop.permute.xlu0 %804
      %806 = vrot.lane.b32.xlu0 %v561, 32
      %v807 = vpop.permute.xlu0 %806
      %808 = vrot.lane.b32.xlu0 %v562, 32
      %v809 = vpop.permute.xlu0 %808
      %810 = vrot.lane.b32.xlu0 %v563, 32
      %v811 = vpop.permute.xlu0 %810
      %vm820 = vcmask 31744
      %v821 = vsel %vm820, %v482, %v573
      %v822 = vsel %vm820, %v483, %v575
      %v823 = vsel %vm820, %v484, %v577
      %v824 = vsel %vm820, %v485, %v579
      %v825 = vsel %vm820, %v486, %v581
      %v826 = vsel %vm820, %v487, %v583
      %v827 = vsel %vm820, %v488, %v585
      %v828 = vsel %vm820, %v489, %v587
      %vm829 = vcmask 64512
      %v830 = vsel %vm829, %v821, %v605
      %v831 = vsel %vm829, %v822, %v607
      %v832 = vsel %vm829, %v823, %v609
      %v833 = vsel %vm829, %v824, %v611
      %v834 = vsel %vm829, %v825, %v613
      %v835 = vsel %vm829, %v826, %v615
      %v836 = vsel %vm829, %v827, %v617
      %v837 = vsel %vm829, %v828, %v619
      %vm838 = vcmask 97280
      %v839 = vsel %vm838, %v830, %v637
      %v840 = vsel %vm838, %v831, %v639
      %v841 = vsel %vm838, %v832, %v641
      %v842 = vsel %vm838, %v833, %v643
      %v843 = vsel %vm838, %v834, %v645
      %v844 = vsel %vm838, %v835, %v647
      %v845 = vsel %vm838, %v836, %v649
      %v846 = vsel %vm838, %v837, %v651
      %vm847 = vcmask 130048
      %v848 = vsel %vm847, %v839, %v669
      %v849 = vsel %vm847, %v840, %v671
      %v850 = vsel %vm847, %v841, %v673
      %v851 = vsel %vm847, %v842, %v675
      %v852 = vsel %vm847, %v843, %v677
      %v853 = vsel %vm847, %v844, %v679
      %v854 = vsel %vm847, %v845, %v681
      %v855 = vsel %vm847, %v846, %v683
      %vm856 = vcmask 162816
      %v857 = vsel %vm856, %v848, %v701
      %v858 = vsel %vm856, %v849, %v703
      %v859 = vsel %vm856, %v850, %v705
      %v860 = vsel %vm856, %v851, %v707
      %v861 = vsel %vm856, %v852, %v709
      %v862 = vsel %vm856, %v853, %v711
      %v863 = vsel %vm856, %v854, %v713
      %v864 = vsel %vm856, %v855, %v715
      %vm865 = vcmask 195584
      %v866 = vsel %vm865, %v857, %v733
      %v867 = vsel %vm865, %v858, %v735
      %v868 = vsel %vm865, %v859, %v737
      %v869 = vsel %vm865, %v860, %v739
      %v870 = vsel %vm865, %v861, %v741
      %v871 = vsel %vm865, %v862, %v743
      %v872 = vsel %vm865, %v863, %v745
      %v873 = vsel %vm865, %v864, %v747
      %vm874 = vcmask 228352
      %v875 = vsel %vm874, %v866, %v765
      %v876 = vsel %vm874, %v867, %v767
      %v877 = vsel %vm874, %v868, %v769
      %v878 = vsel %vm874, %v869, %v771
      %v879 = vsel %vm874, %v870, %v773
      %v880 = vsel %vm874, %v871, %v775
      %v881 = vsel %vm874, %v872, %v777
      %v882 = vsel %vm874, %v873, %v779
      %vm883 = vcmask 261120
      %v884 = vsel %vm883, %v875, %v797
      %v885 = vsel %vm883, %v876, %v799
      %v886 = vsel %vm883, %v877, %v801
      %v887 = vsel %vm883, %v878, %v803
      %v888 = vsel %vm883, %v879, %v805
      %v889 = vsel %vm883, %v880, %v807
      %v890 = vsel %vm883, %v881, %v809
      %v891 = vsel %vm883, %v882, %v811
      %v892 = vpack.c.bf16 %v885, %v884
      %v893 = vpack.c.bf16 %v887, %v886
      %v894 = vpack.c.bf16 %v889, %v888
      %v895 = vpack.c.bf16 %v891, %v890
      %v896 = vld [vmem:[%s6] sm:$0xf]
      %v897 = vld [vmem:[%s6 + $0x4] sm:$0xf]
      %v898 = vld [vmem:[%s6 + $0x8] sm:$0xf]
      %v899 = vld [vmem:[%s6 + $0xc] sm:$0xf]
      %v900 = vld [vmem:[%s6 + $0x10] sm:$0x3]
      %v901 = vld [vmem:[%s7] sm:$0x1]
      %v903 = vlaneseq
      %v904 = vshrl.u32 %v903, 7
      %v905 = vsub.s32 0, %v904
      %v906 = vrot.slane %v901, %v905
      %v913 = vunpack.c.l.b16 %v896
      %v914 = vunpack.c.l.b16 %v897
      %v915 = vunpack.c.l.b16 %v898
      %v916 = vunpack.c.l.b16 %v899
      %v917 = vunpack.c.l.b16 %v900
      %v918 = vpack.c.b16 %v914, %v913
      %v919 = vpack.c.b16 %v916, %v915
      %v920 = vpack.c.b16 %v917, %v917
      %vm923 = vcmask 293888
      %v925 = vsel %vm923, %v892, 0
      %v928 = vsel %vm923, %v893, 0
      %v931 = vsel %vm923, %v894, 0
      %v934 = vsel %vm923, %v895, 0
      %vm936 = vcmask 1041408
      %v938 = vsel %vm936, %v920, 0
      %940 = vmatprep.subr.bf16.mxu0 0
      %941 = vmatpush1.bf16.msra.mxu0 %v918
      %942 = vmatprep.subr.bf16.mxu0 0
      %943 = vmatpush1.bf16.msra.mxu0 %v919
      %944 = vmatprep.subr.bf16.mxu0 0
      %945 = vmatpush1.bf16.msra.mxu0 %v938
      %946 = vmatprep.subr.bf16.mxu0 0
      %947 = vmatpush1.bf16.msra.mxu0 0
      %948 = vmatprep.subr.bf16.mxu0 0
      %949 = vmatpush1.bf16.msra.mxu0 0
      %950 = vmatprep.subr.bf16.mxu0 0
      %951 = vmatpush1.bf16.msra.mxu0 0
      %952 = vmatprep.subr.bf16.mxu0 0
      %953 = vmatpush1.bf16.msra.mxu0 0
      %954 = vmatprep.subr.bf16.mxu0 0
      %955 = vmatpush1.bf16.msra.mxu0 0
      %956 = vmatprep.subr.bf16.mxu0 0
      %957 = vmatpush1.bf16.msra.mxu0 0
      %958 = vmatprep.subr.bf16.mxu0 0
      %959 = vmatpush1.bf16.msra.mxu0 0
      %960 = vmatprep.subr.bf16.mxu0 0
      %961 = vmatpush1.bf16.msra.mxu0 0
      %962 = vmatprep.subr.bf16.mxu0 0
      %963 = vmatpush1.bf16.msra.mxu0 0
      %964 = vmatprep.subr.bf16.mxu0 0
      %965 = vmatpush1.bf16.msra.mxu0 0
      %966 = vmatprep.subr.bf16.mxu0 0
      %967 = vmatpush1.bf16.msra.mxu0 0
      %968 = vmatprep.subr.bf16.mxu0 0
      %969 = vmatpush1.bf16.msra.mxu0 0
      %970 = vmatprep.subr.bf16.mxu0 0
      %971 = vmatpush1.bf16.msra.mxu0 0
      %972 = vmatprep.mubr.bf16.mxu0 0
      %973 = vmatmul.mubr.bf16.gmra.mrb[0].mxu0 %v925
      %v974 = vpop.f32.mrb[0].mxu0
      %v975 = vadd.f32 %v906, %v974
      %v976 = vpop.f32.mrb[0].mxu0
      %v977 = vpop.f32.mrb[0].mxu0
      %v978 = vadd.f32 %v906, %v977
      %v979 = vpop.f32.mrb[0].mxu0
      %980 = vmatprep.mubr.bf16.mxu0 0
      %981 = vmatmul.mubr.bf16.gmra.mrb[0].mxu0 %v928
      %v982 = vpop.f32.mrb[0].mxu0
      %v983 = vadd.f32 %v906, %v982
      %v984 = vpop.f32.mrb[0].mxu0
      %v985 = vpop.f32.mrb[0].mxu0
      %v986 = vadd.f32 %v906, %v985
      %v987 = vpop.f32.mrb[0].mxu0
      %988 = vmatprep.mubr.bf16.mxu0 0
      %989 = vmatmul.mubr.bf16.gmra.mrb[0].mxu0 %v931
      %v990 = vpop.f32.mrb[0].mxu0
      %v991 = vadd.f32 %v906, %v990
      %v992 = vpop.f32.mrb[0].mxu0
      %v993 = vpop.f32.mrb[0].mxu0
      %v994 = vadd.f32 %v906, %v993
      %v995 = vpop.f32.mrb[0].mxu0
      %996 = vmatprep.mubr.bf16.mxu0 0
      %997 = vmatmul.mubr.bf16.gmra.mrb[0].mxu0 %v934
      %v998 = vpop.f32.mrb[0].mxu0
      %v999 = vadd.f32 %v906, %v998
      %v1000 = vpop.f32.mrb[0].mxu0
      %v1001 = vpop.f32.mrb[0].mxu0
      %v1002 = vadd.f32 %v906, %v1001
      %v1003 = vpop.f32.mrb[0].mxu0
      %1004 = vdwg.mxu0
      %v1005 = vmax.f32 %v975, 0.0
      %v1006 = vmax.f32 %v978, 0.0
      %v1007 = vmax.f32 %v983, 0.0
      %v1008 = vmax.f32 %v986, 0.0
      %v1009 = vmax.f32 %v991, 0.0
      %v1010 = vmax.f32 %v994, 0.0
      %v1011 = vmax.f32 %v999, 0.0
      %v1012 = vmax.f32 %v1002, 0.0
      %v1013 = vpack.c.bf16 %v1006, %v1005
      %v1014 = vpack.c.bf16 %v1008, %v1007
      %v1015 = vpack.c.bf16 %v1010, %v1009
      %v1016 = vpack.c.bf16 %v1012, %v1011
      %v1017 = vld [vmem:[%s8] sm:$0xf]
      %v1018 = vld [vmem:[%s8 + $0x4] sm:$0xf]
      %v1019 = vld [vmem:[%s8 + $0x8] sm:$0xf]
      %v1020 = vld [vmem:[%s8 + $0xc] sm:$0xf]
      %v1021 = vld [vmem:[%s9] sm:$0x1]
      %v1023 = vlaneseq
      %v1024 = vshrl.u32 %v1023, 7
      %v1025 = vsub.s32 0, %v1024
      %v1026 = vrot.slane %v1021, %v1025
      %v1032 = vunpack.c.l.b16 %v1017
      %v1033 = vunpack.c.l.b16 %v1018
      %v1034 = vunpack.c.l.b16 %v1019
      %v1035 = vunpack.c.l.b16 %v1020
      %v1036 = vpack.c.b16 %v1033, %v1032
      %v1037 = vpack.c.b16 %v1035, %v1034
      %v1041 = vsel %vm883, %v1013, 0
      %v1044 = vsel %vm883, %v1014, 0
      %v1047 = vsel %vm883, %v1015, 0
      %v1050 = vsel %vm883, %v1016, 0
      %1052 = vmatprep.subr.bf16.mxu0 0
      %1053 = vmatpush1.bf16.msra.mxu0 %v1036
      %1054 = vmatprep.subr.bf16.mxu0 0
      %1055 = vmatpush1.bf16.msra.mxu0 %v1037
      %1056 = vmatprep.subr.bf16.mxu0 0
      %1057 = vmatpush1.bf16.msra.mxu0 0
      %1058 = vmatprep.subr.bf16.mxu0 0
      %1059 = vmatpush1.bf16.msra.mxu0 0
      %1060 = vmatprep.subr.bf16.mxu0 0
      %1061 = vmatpush1.bf16.msra.mxu0 0
      %1062 = vmatprep.subr.bf16.mxu0 0
      %1063 = vmatpush1.bf16.msra.mxu0 0
      %1064 = vmatprep.subr.bf16.mxu0 0
      %1065 = vmatpush1.bf16.msra.mxu0 0
      %1066 = vmatprep.subr.bf16.mxu0 0
      %1067 = vmatpush1.bf16.msra.mxu0 0
      %1068 = vmatprep.subr.bf16.mxu0 0
      %1069 = vmatpush1.bf16.msra.mxu0 0
      %1070 = vmatprep.subr.bf16.mxu0 0
      %1071 = vmatpush1.bf16.msra.mxu0 0
      %1072 = vmatprep.subr.bf16.mxu0 0
      %1073 = vmatpush1.bf16.msra.mxu0 0
      %1074 = vmatprep.subr.bf16.mxu0 0
      %1075 = vmatpush1.bf16.msra.mxu0 0
      %1076 = vmatprep.subr.bf16.mxu0 0
      %1077 = vmatpush1.bf16.msra.mxu0 0
      %1078 = vmatprep.subr.bf16.mxu0 0
      %1079 = vmatpush1.bf16.msra.mxu0 0
      %1080 = vmatprep.subr.bf16.mxu0 0
      %1081 = vmatpush1.bf16.msra.mxu0 0
      %1082 = vmatprep.subr.bf16.mxu0 0
      %1083 = vmatpush1.bf16.msra.mxu0 0
      %1084 = vmatprep.mubr.bf16.mxu0 0
      %1085 = vmatmul.mubr.bf16.gmra.mrb[0].mxu0 %v1041
      %v1086 = vpop.f32.mrb[0].mxu0
      %v1087 = vadd.f32 %v1026, %v1086
      %v1088 = vpop.f32.mrb[0].mxu0
      %v1089 = vpop.f32.mrb[0].mxu0
      %v1090 = vadd.f32 %v1026, %v1089
      %v1091 = vpop.f32.mrb[0].mxu0
      %1092 = vmatprep.mubr.bf16.mxu0 0
      %1093 = vmatmul.mubr.bf16.gmra.mrb[0].mxu0 %v1044
      %v1094 = vpop.f32.mrb[0].mxu0
      %v1095 = vadd.f32 %v1026, %v1094
      %v1096 = vpop.f32.mrb[0].mxu0
      %v1097 = vpop.f32.mrb[0].mxu0
      %v1098 = vadd.f32 %v1026, %v1097
      %v1099 = vpop.f32.mrb[0].mxu0
      %1100 = vmatprep.mubr.bf16.mxu0 0
      %1101 = vmatmul.mubr.bf16.gmra.mrb[0].mxu0 %v1047
      %v1102 = vpop.f32.mrb[0].mxu0
      %v1103 = vadd.f32 %v1026, %v1102
      %v1104 = vpop.f32.mrb[0].mxu0
      %v1105 = vpop.f32.mrb[0].mxu0
      %v1106 = vadd.f32 %v1026, %v1105
      %v1107 = vpop.f32.mrb[0].mxu0
      %1108 = vmatprep.mubr.bf16.mxu0 0
      %1109 = vmatmul.mubr.bf16.gmra.mrb[0].mxu0 %v1050
      %v1110 = vpop.f32.mrb[0].mxu0
      %v1111 = vadd.f32 %v1026, %v1110
      %v1112 = vpop.f32.mrb[0].mxu0
      %v1113 = vpop.f32.mrb[0].mxu0
      %v1114 = vadd.f32 %v1026, %v1113
      %v1115 = vpop.f32.mrb[0].mxu0
      %1116 = vdwg.mxu0
      %1117 = vxpose.xlu0.b32.start [1/16] %v1087, 128
      %1118 = vxpose.xlu0.b32.cont [2/16] %v1090, 128
      %1119 = vxpose.xlu0.b32.cont [3/16] %v1095, 128
      %1120 = vxpose.xlu0.b32.cont [4/16] %v1098, 128
      %1121 = vxpose.xlu0.b32.cont [5/16] %v1103, 128
      %1122 = vxpose.xlu0.b32.cont [6/16] %v1106, 128
      %1123 = vxpose.xlu0.b32.cont [7/16] %v1111, 128
      %1124 = vxpose.xlu0.b32.cont [8/16] %v1114, 128
      %1125 = vxpose.xlu0.b32.cont [9/16] 0.0, 128
      %1126 = vxpose.xlu0.b32.cont [10/16] 0.0, 128
      %1127 = vxpose.xlu0.b32.cont [11/16] 0.0, 128
      %1128 = vxpose.xlu0.b32.cont [12/16] 0.0, 128
      %1129 = vxpose.xlu0.b32.cont [13/16] 0.0, 128
      %1130 = vxpose.xlu0.b32.cont [14/16] 0.0, 128
      %1131 = vxpose.xlu0.b32.cont [15/16] 0.0, 128
      %1132 = vxpose.xlu0.b32.end [16/16] 0.0, 128
      %v1133 = vpop.trf.xlu0
      %v1134 = vpop.trf.xlu0
      %v1135 = vpop.trf.xlu0
      %v1136 = vpop.trf.xlu0
      %v1137 = vpop.trf.xlu0
      %v1138 = vpop.trf.xlu0
      %v1139 = vpop.trf.xlu0
      %v1140 = vpop.trf.xlu0
      %v1141 = vpop.trf.xlu0
      %v1142 = vpop.trf.xlu0
      %v1143 = vpop.trf.xlu0
      %v1144 = vpop.trf.xlu0
      %v1145 = vpop.trf.xlu0
      %v1146 = vpop.trf.xlu0
      %v1147 = vpop.trf.xlu0
      %v1148 = vpop.trf.xlu0
      %v1149 = vpack.c.bf16 %v1133, %v1133
      %vm1150 = vcmask 518144
      %vm1151 = vsmask.f32 2304
      %vm1152 = vmand %vm1150, %vm1151
      %v1153 = vld [vmem:[%s477] sm:$0x7]
      %v1154 = vsel %vm1152, %v1149, %v1153
      %1155 = vst [vmem:[%s477] sm:$0x7] %v1154
      %p1156 = scmp.lt.s32.totalorder %s25, 1
      %s1157 = scalar_select %p1156, %s25, 1
      %p1158 = scmp.lt.s32.totalorder %s26, 0
      %s1159 = scalar_select %p1158, %s26, 0
      %s1160 = sadd.s32 %s1159, %s1157
      %s1161 = smul.addr %s1160, 4
      %s1162 = scalar_lea.vmem %s10, %s1161
      // Predicated region
      $region61: #{tpu_custom_call.1} parent=59 // pred_check
        %p1163 = pneg %p293
      $region62: #{tpu_custom_call.1} parent=59 // pred_check_branch
        %1165 = sbr.rel (%p1163) target = $region64
      $region63: #{tpu_custom_call.1} parent=59 // pred_region
        _
      $region64: #{tpu_custom_call.1} parent=59 // pred_fallthru
        _
    $region60: #{tpu_custom_call.1} parent=5 // pred_fallthru
      _
    %p1166 = scmp.le.s32.totalorder 2, %s16
    // Predicated region
    $region65: #{tpu_custom_call.1} parent=5 // pred_check
      %p1167 = pneg %p1166
    $region66: #{tpu_custom_call.1} parent=5 // pred_check_branch
      %1169 = sbr.rel (%p1167) target = $region68
    $region67: #{tpu_custom_call.1} parent=5 // pred_region
      %s1170 = ssub.s32 %s16, 2
      // Predicated region
      $region69: #{tpu_custom_call.1} parent=67 // pred_check
        %p1171 = pneg %p299
      $region70: #{tpu_custom_call.1} parent=67 // pred_check_branch
        %1173 = sbr.rel (%p1171) target = $region72
      $region71: #{tpu_custom_call.1} parent=67 // pred_region
        %p1174 = scmp.lt.s32.totalorder %s27, 1
        %s1175 = scalar_select %p1174, %s27, 1
        %p1176 = scmp.lt.s32.totalorder %s28, 0
        %s1177 = scalar_select %p1176, %s28, 0
        %s1178 = sadd.s32 %s1177, %s1175
        %s1179 = smul.addr %s1178, 4
        %s1180 = scalar_lea.vmem %s10, %s1179
      $region72: #{tpu_custom_call.1} parent=67 // pred_fallthru
        _
    $region68: #{tpu_custom_call.1} parent=5 // pred_fallthru
      _
  $region6: #{tpu_custom_call.1} parent=0 // loop_footer
    %s20 = sadd.s32 1, %s16
  $region7: #{tpu_custom_call.1} parent=0 // loop_footer_branch
    %15 = sbr.rel target = $region3
  $region8: #{tpu_custom_call.1} parent=0 // loop_exit
    _

</llo_original>
